<compile_context>
chip_gen: v5e
topology: v5e:2x2
jax: 0.10.0
libtpu: 0.0.40
codegen_flags: <defaults>
</compile_context>

<pallas_src>
import functools

import jax
import jax.numpy as jnp
from jax.experimental import pallas as pl
from jax.experimental.pallas import tpu as pltpu

_LANE = 128
_SUBLANE = 8


def _round_up(x, m):
    return ((x + m - 1) // m) * m


def _round_down(x, m):
    return (x // m) * m


def _cdiv(a, b):
    return -(-a // b)


def _vmem_capacity_bytes():
    try:
        return int(pltpu.get_tpu_info().vmem_capacity_bytes)
    except Exception:
        return 64 << 20  # conservative fallback (v7x per-TensorCore VMEM)


def _choose_tiles(G, HW):
    """Pick (g_tile, hw_tile, vmem_limit_bytes) for x viewed as (G, HW)."""
    vmem = _vmem_capacity_bytes()
    if vmem >= (100 << 20):
        # v5e / v6e: 128 MiB physical VMEM -> big blocks, raise scoped limit.
        budget_elems = 2 * 1024 * 1024      # 8 MiB f32 per block
        vmem_limit = 96 << 20
    else:
        # v7x: only 64 MiB per TensorCore -> tighter block budget.
        budget_elems = 1024 * 1024          # 4 MiB f32 per block
        vmem_limit = 48 << 20

    # Lane (last) axis: as wide as the budget allows with at least one sublane
    # group of rows; multiples of 128 unless the whole spatial extent is
    # narrower than a single lane group (then use the full dim).
    g_min = G if G < _SUBLANE else _SUBLANE
    if HW <= _LANE:
        hw_tile = HW
    else:
        hw_tile = min(_round_down(HW, _LANE),
                      max(_LANE, _round_down(budget_elems // g_min, _LANE)))

    # Sublane axis: fill the remaining budget with (n, c) rows.  Param blocks
    # are (K, g_tile, 1) -> ~11*g_tile*512 B of VMEM, negligible in the budget.
    if G <= _SUBLANE:
        g_tile = G
    else:
        g_tile = max(_SUBLANE,
                     min(_round_down(G, _SUBLANE),
                         _round_down(budget_elems // hw_tile, _SUBLANE)))

    # Guarantee >= 2 grid steps whenever possible so both v7x TensorCores get
    # work ("parallel" dimension semantics only help with > 1 step).
    if _cdiv(G, g_tile) * _cdiv(HW, hw_tile) < 2:
        if hw_tile > _LANE:
            hw_tile = _round_up(_cdiv(hw_tile, 2), _LANE)
        elif g_tile >= 2 * _SUBLANE:
            g_tile = _round_up(_cdiv(g_tile, 2), _SUBLANE)

    return g_tile, hw_tile, vmem_limit


def _bit_estimator_kernel(x_ref, sph_ref, b_ref, tha_ref, o_ref):
    # x_ref / o_ref: (g_tile, hw_tile)  -- sublanes = (n, c) rows, lanes = spatial.
    # sph_ref / b_ref: (4, g_tile, 1); tha_ref: (3, g_tile, 1).  Params are
    # already softplus/tanh-activated in the wrapper; each is lane-broadcast
    # exactly once per block here (cheap, off the VPU/EUP hot slots).
    x = x_ref[...].astype(jnp.float32)

    for i in range(3):
        y = x * sph_ref[i] + b_ref[i]
        x = y + jnp.tanh(y) * tha_ref[i]
    x = x * sph_ref[3] + b_ref[3]

    # Exact sigmoid via tanh: sigmoid(x) = 0.5*(1 + tanh(x/2)).
    # Single EUP op, no approx reciprocal, no abs/select filler.
    o_ref[...] = (0.5 * (jnp.tanh(0.5 * x) + 1.0)).astype(o_ref.dtype)


@functools.partial(jax.jit, static_argnames=("out_dtype",))
def bit_estimator_forward(x_nchw, h_all, b_all, a_all, *, out_dtype=None):
    """BitEstimator.get_cdf: sigmoid(f4(f3(f2(f1(x))))) with per-channel params.

    x_nchw: (N, C, H, W).  h_all/b_all: (4, C), a_all: (3, C).
    out_dtype: output dtype (defaults to x_nchw.dtype).  For the lowest HBM
    traffic on this memory-bound op, pass x already in bfloat16 (compute is
    f32 internally either way).
    """
    N, C, H, W = x_nchw.shape
    G, HW = N * C, H * W
    out_dtype = x_nchw.dtype if out_dtype is None else out_dtype

    # Free reshape (contiguous), no padding, no extra HBM pass.
    x2 = x_nchw.reshape(G, HW)

    # Hoist parameter-only transcendentals (tiny (K, C) tensors) out of the
    # kernel and expand to one value per (n, c) row: row g = n*C + c.
    sp_h = jax.nn.softplus(h_all.astype(jnp.float32))   # (4, C)
    th_a = jnp.tanh(a_all.astype(jnp.float32))          # (3, C)
    bb = b_all.astype(jnp.float32)                      # (4, C)

    def _per_row(p):  # (K, C) -> (K, N*C, 1)
        K = p.shape[0]
        return jnp.broadcast_to(p[:, None, :], (K, N, C)).reshape(K, G, 1)

    sp_h_g, b_g, th_a_g = _per_row(sp_h), _per_row(bb), _per_row(th_a)

    g_tile, hw_tile, vmem_limit = _choose_tiles(G, HW)
    # Grid order (g outer, spatial inner) lets Pallas elide the param DMA
    # across consecutive spatial steps (param index_maps depend only on g).
    grid = (_cdiv(G, g_tile), _cdiv(HW, hw_tile))

    out2 = pl.pallas_call(
        _bit_estimator_kernel,
        out_shape=jax.ShapeDtypeStruct((G, HW), out_dtype),
        grid_spec=pltpu.PrefetchScalarGridSpec(
            num_scalar_prefetch=0,
            grid=grid,
            in_specs=[
                pl.BlockSpec((g_tile, hw_tile), lambda g, r: (g, r)),
                pl.BlockSpec((4, g_tile, 1), lambda g, r: (0, g, 0)),
                pl.BlockSpec((4, g_tile, 1), lambda g, r: (0, g, 0)),
                pl.BlockSpec((3, g_tile, 1), lambda g, r: (0, g, 0)),
            ],
            out_specs=pl.BlockSpec((g_tile, hw_tile), lambda g, r: (g, r)),
        ),
        compiler_params=pltpu.CompilerParams(
            dimension_semantics=("parallel", "parallel"),
            vmem_limit_bytes=vmem_limit,
        ),
    )(x2, sp_h_g, b_g, th_a_g)

    return out2.reshape(N, C, H, W)


def _reference_forward(x_nchw, h_all, b_all, a_all):
    # Pure-JAX reference of the same math (for correctness check).
    x = x_nchw.astype(jnp.float32)

    def stage(x, h, b, a):
        y = x * jax.nn.softplus(h)[None, :, None, None] + b[None, :, None, None]
        if a is None:
            return y
        return y + jnp.tanh(y) * jnp.tanh(a)[None, :, None, None]

    x = stage(x, h_all[0], b_all[0], a_all[0])
    x = stage(x, h_all[1], b_all[1], a_all[1])
    x = stage(x, h_all[2], b_all[2], a_all[2])
    x = stage(x, h_all[3], b_all[3], None)
    return jax.nn.sigmoid(x)


if __name__ == "__main__":
    # Small shapes consistent with the module: N=2, C=4 channels, 16x16 spatial.
    N, C, H, W = 2, 4, 16, 16

    key = jax.random.PRNGKey(0)
    kx, kh, kb, ka = jax.random.split(key, 4)

    x = jax.random.normal(kx, (N, C, H, W), dtype=jnp.float32)
    # torch.nn.init.normal_(..., 0, 0.01) -> N(0, 0.01) per-channel params.
    h_all = 0.01 * jax.random.normal(kh, (4, C), dtype=jnp.float32)
    b_all = 0.01 * jax.random.normal(kb, (4, C), dtype=jnp.float32)
    a_all = 0.01 * jax.random.normal(ka, (3, C), dtype=jnp.float32)

    ref = _reference_forward(x, h_all, b_all, a_all)

    # f32 I/O path (exact tanh-form sigmoid -> f32-level parity).
    out = bit_estimator_forward(x, h_all, b_all, a_all)
    out = jax.block_until_ready(out)
    assert out.shape == (N, C, H, W)
    assert out.dtype == x.dtype
    assert jnp.allclose(out, ref, atol=1e-5, rtol=1e-5), float(
        jnp.max(jnp.abs(out - ref)))

    # bf16 I/O path: caller supplies bf16 activations -> half the HBM traffic
    # of this streaming kernel; compute stays f32 inside the kernel.
    out_bf16 = bit_estimator_forward(x.astype(jnp.bfloat16), h_all, b_all, a_all)
    out_bf16 = jax.block_until_ready(out_bf16)
    assert out_bf16.dtype == jnp.bfloat16
    assert jnp.allclose(out_bf16.astype(jnp.float32), ref, atol=2e-2, rtol=2e-2)

    # TODO(synk): update() / encode / decode_stream rely on the external
    # rANS / C++ extensions (MLCodec_rans, MLCodec_CXX) for CDF quantization
    # and entropy coding; only the forward (get_cdf) hot path is a Pallas kernel.
    print("KERNEL_OK")
</pallas_src>

<mosaic_0001>
module attributes {stable_mosaic.version = 11 : i64} {
  func.func @_bit_estimator_kernel(%arg0: i32, %arg1: i32, %arg2: memref<8x128xf32, #tpu.memory_space<vmem>>, %arg3: memref<4x8x1xf32, #tpu.memory_space<vmem>>, %arg4: memref<4x8x1xf32, #tpu.memory_space<vmem>>, %arg5: memref<3x8x1xf32, #tpu.memory_space<vmem>>, %arg6: memref<8x128xf32, #tpu.memory_space<vmem>>) attributes {dimension_semantics = [#tpu.dimension_semantics<parallel>, #tpu.dimension_semantics<parallel>], iteration_bounds = array<i64: 1, 2>, scalar_prefetch = 0 : i64, scratch_operands = 0 : i64, tpu.core_type = #tpu.core_type<tc>, window_params = [{transform_indices = @transform_0, window_bounds = array<i64: 8, 128>}, {transform_indices = @transform_1, window_bounds = array<i64: 4, 8, 1>}, {transform_indices = @transform_2, window_bounds = array<i64: 4, 8, 1>}, {transform_indices = @transform_3, window_bounds = array<i64: 3, 8, 1>}, {transform_indices = @transform_4, window_bounds = array<i64: 8, 128>}]} {
    %c0 = arith.constant 0 : index
    %c0_0 = arith.constant 0 : index
    %0 = vector.load %arg2[%c0, %c0_0] : memref<8x128xf32, #tpu.memory_space<vmem>>, vector<8x128xf32>
    %c0_1 = arith.constant 0 : index
    %c0_2 = arith.constant 0 : index
    %c0_3 = arith.constant 0 : index
    %1 = vector.load %arg3[%c0_1, %c0_2, %c0_3] : memref<4x8x1xf32, #tpu.memory_space<vmem>>, vector<1x8x1xf32>
    %2 = vector.shape_cast %1 : vector<1x8x1xf32> to vector<8x1xf32>
    %3 = vector.broadcast %2 : vector<8x1xf32> to vector<8x128xf32>
    %4 = arith.mulf %0, %3 : vector<8x128xf32>
    %c0_4 = arith.constant 0 : index
    %c0_5 = arith.constant 0 : index
    %c0_6 = arith.constant 0 : index
    %5 = vector.load %arg4[%c0_4, %c0_5, %c0_6] : memref<4x8x1xf32, #tpu.memory_space<vmem>>, vector<1x8x1xf32>
    %6 = vector.shape_cast %5 : vector<1x8x1xf32> to vector<8x1xf32>
    %7 = vector.broadcast %6 : vector<8x1xf32> to vector<8x128xf32>
    %8 = arith.addf %4, %7 : vector<8x128xf32>
    %9 = math.tanh %8 : vector<8x128xf32>
    %c0_7 = arith.constant 0 : index
    %c0_8 = arith.constant 0 : index
    %c0_9 = arith.constant 0 : index
    %10 = vector.load %arg5[%c0_7, %c0_8, %c0_9] : memref<3x8x1xf32, #tpu.memory_space<vmem>>, vector<1x8x1xf32>
    %11 = vector.shape_cast %10 : vector<1x8x1xf32> to vector<8x1xf32>
    %12 = vector.broadcast %11 : vector<8x1xf32> to vector<8x128xf32>
    %13 = arith.mulf %9, %12 : vector<8x128xf32>
    %14 = arith.addf %8, %13 : vector<8x128xf32>
    %c1 = arith.constant 1 : index
    %c0_10 = arith.constant 0 : index
    %c0_11 = arith.constant 0 : index
    %15 = vector.load %arg3[%c1, %c0_10, %c0_11] : memref<4x8x1xf32, #tpu.memory_space<vmem>>, vector<1x8x1xf32>
    %16 = vector.shape_cast %15 : vector<1x8x1xf32> to vector<8x1xf32>
    %17 = vector.broadcast %16 : vector<8x1xf32> to vector<8x128xf32>
    %18 = arith.mulf %14, %17 : vector<8x128xf32>
    %c1_12 = arith.constant 1 : index
    %c0_13 = arith.constant 0 : index
    %c0_14 = arith.constant 0 : index
    %19 = vector.load %arg4[%c1_12, %c0_13, %c0_14] : memref<4x8x1xf32, #tpu.memory_space<vmem>>, vector<1x8x1xf32>
    %20 = vector.shape_cast %19 : vector<1x8x1xf32> to vector<8x1xf32>
    %21 = vector.broadcast %20 : vector<8x1xf32> to vector<8x128xf32>
    %22 = arith.addf %18, %21 : vector<8x128xf32>
    %23 = math.tanh %22 : vector<8x128xf32>
    %c1_15 = arith.constant 1 : index
    %c0_16 = arith.constant 0 : index
    %c0_17 = arith.constant 0 : index
    %24 = vector.load %arg5[%c1_15, %c0_16, %c0_17] : memref<3x8x1xf32, #tpu.memory_space<vmem>>, vector<1x8x1xf32>
    %25 = vector.shape_cast %24 : vector<1x8x1xf32> to vector<8x1xf32>
    %26 = vector.broadcast %25 : vector<8x1xf32> to vector<8x128xf32>
    %27 = arith.mulf %23, %26 : vector<8x128xf32>
    %28 = arith.addf %22, %27 : vector<8x128xf32>
    %c2 = arith.constant 2 : index
    %c0_18 = arith.constant 0 : index
    %c0_19 = arith.constant 0 : index
    %29 = vector.load %arg3[%c2, %c0_18, %c0_19] : memref<4x8x1xf32, #tpu.memory_space<vmem>>, vector<1x8x1xf32>
    %30 = vector.shape_cast %29 : vector<1x8x1xf32> to vector<8x1xf32>
    %31 = vector.broadcast %30 : vector<8x1xf32> to vector<8x128xf32>
    %32 = arith.mulf %28, %31 : vector<8x128xf32>
    %c2_20 = arith.constant 2 : index
    %c0_21 = arith.constant 0 : index
    %c0_22 = arith.constant 0 : index
    %33 = vector.load %arg4[%c2_20, %c0_21, %c0_22] : memref<4x8x1xf32, #tpu.memory_space<vmem>>, vector<1x8x1xf32>
    %34 = vector.shape_cast %33 : vector<1x8x1xf32> to vector<8x1xf32>
    %35 = vector.broadcast %34 : vector<8x1xf32> to vector<8x128xf32>
    %36 = arith.addf %32, %35 : vector<8x128xf32>
    %37 = math.tanh %36 : vector<8x128xf32>
    %c2_23 = arith.constant 2 : index
    %c0_24 = arith.constant 0 : index
    %c0_25 = arith.constant 0 : index
    %38 = vector.load %arg5[%c2_23, %c0_24, %c0_25] : memref<3x8x1xf32, #tpu.memory_space<vmem>>, vector<1x8x1xf32>
    %39 = vector.shape_cast %38 : vector<1x8x1xf32> to vector<8x1xf32>
    %40 = vector.broadcast %39 : vector<8x1xf32> to vector<8x128xf32>
    %41 = arith.mulf %37, %40 : vector<8x128xf32>
    %42 = arith.addf %36, %41 : vector<8x128xf32>
    %c3 = arith.constant 3 : index
    %c0_26 = arith.constant 0 : index
    %c0_27 = arith.constant 0 : index
    %43 = vector.load %arg3[%c3, %c0_26, %c0_27] : memref<4x8x1xf32, #tpu.memory_space<vmem>>, vector<1x8x1xf32>
    %44 = vector.shape_cast %43 : vector<1x8x1xf32> to vector<8x1xf32>
    %45 = vector.broadcast %44 : vector<8x1xf32> to vector<8x128xf32>
    %46 = arith.mulf %42, %45 : vector<8x128xf32>
    %c3_28 = arith.constant 3 : index
    %c0_29 = arith.constant 0 : index
    %c0_30 = arith.constant 0 : index
    %47 = vector.load %arg4[%c3_28, %c0_29, %c0_30] : memref<4x8x1xf32, #tpu.memory_space<vmem>>, vector<1x8x1xf32>
    %48 = vector.shape_cast %47 : vector<1x8x1xf32> to vector<8x1xf32>
    %49 = vector.broadcast %48 : vector<8x1xf32> to vector<8x128xf32>
    %50 = arith.addf %46, %49 : vector<8x128xf32>
    %cst = arith.constant 5.000000e-01 : f32
    %51 = vector.broadcast %cst : f32 to vector<8x128xf32>
    %52 = arith.mulf %51, %50 : vector<8x128xf32>
    %53 = math.tanh %52 : vector<8x128xf32>
    %cst_31 = arith.constant 1.000000e+00 : f32
    %54 = vector.broadcast %cst_31 : f32 to vector<8x128xf32>
    %55 = arith.addf %53, %54 : vector<8x128xf32>
    %cst_32 = arith.constant 5.000000e-01 : f32
    %56 = vector.broadcast %cst_32 : f32 to vector<8x128xf32>
    %57 = arith.mulf %56, %55 : vector<8x128xf32>
    %c0_33 = arith.constant 0 : index
    %c0_34 = arith.constant 0 : index
    %58 = vector.load %arg6[%c0_33, %c0_34] : memref<8x128xf32, #tpu.memory_space<vmem>>, vector<8x128xf32>
    tpu.vector_store %arg6[%c0_33, %c0_34], %57 {strides = array<i32>} : memref<8x128xf32, #tpu.memory_space<vmem>>, vector<8x128xf32>,
    return
  }
  func.func @transform_0(%arg0: i32, %arg1: i32) -> (i32, i32) {
    %c0_i32 = arith.constant 0 : i32
    return %arg0, %arg1 : i32, i32
  }
  func.func @transform_1(%arg0: i32, %arg1: i32) -> (i32, i32, i32) {
    %c0_i32 = arith.constant 0 : i32
    %c0_i32_0 = arith.constant 0 : i32
    %c0_i32_1 = arith.constant 0 : i32
    return %c0_i32, %arg0, %c0_i32_0 : i32, i32, i32
  }
  func.func @transform_2(%arg0: i32, %arg1: i32) -> (i32, i32, i32) {
    %c0_i32 = arith.constant 0 : i32
    %c0_i32_0 = arith.constant 0 : i32
    %c0_i32_1 = arith.constant 0 : i32
    return %c0_i32, %arg0, %c0_i32_0 : i32, i32, i32
  }
  func.func @transform_3(%arg0: i32, %arg1: i32) -> (i32, i32, i32) {
    %c0_i32 = arith.constant 0 : i32
    %c0_i32_0 = arith.constant 0 : i32
    %c0_i32_1 = arith.constant 0 : i32
    return %c0_i32, %arg0, %c0_i32_0 : i32, i32, i32
  }
  func.func @transform_4(%arg0: i32, %arg1: i32) -> (i32, i32) {
    %c0_i32 = arith.constant 0 : i32
    return %arg0, %arg1 : i32, i32
  }
}

</mosaic_0001>

<llo_original>
// kernel: bit_estimator_forward.1
$region0: #{bit_estimator_forward.1}
  #allocation0 [shape = 'u32[]', space=smem, size = 0x4, offset = 0x4, fixed_abs, tag = 'smem constant byte address 0x4 - core index']
  #allocation1 [shape = 'u32[72,128]{1,0:T(1,128)}', space=vmem, size = 0x9000, scoped, tag = 'internal scratch']
  %s0 = inlined_call_operand.vmem [shape: f32[8,256], index: 0, kind: input, shape index: {}]
  %s1 = inlined_call_operand.vmem [shape: f32[4,8,1], index: 1, kind: input, shape index: {}]
  %s2 = inlined_call_operand.vmem [shape: f32[4,8,1], index: 2, kind: input, shape index: {}]
  %s3 = inlined_call_operand.vmem [shape: f32[3,8,1], index: 3, kind: input, shape index: {}]
  %s4 = inlined_call_operand.vmem [shape: f32[8,256], index: 4, kind: output, shape index: {}]
  %s5 = sld [smem:[#allocation0]]
  $region49: #{bit_estimator_forward.1} parent=0
    _
  %s7 = ssub.s32 1, %s5
  %s8 = scalar_select 0, %s7, %s5
  loop: start=0, step=1, limit=4
  $region2: #{bit_estimator_forward.1} parent=0 // loop_pre_header
    _
  $region3: #{bit_estimator_forward.1} parent=0 // loop_header
    %s10 = sphi 0, %s14
    %p11 = scmp.ge.s32.totalorder %s10, 4
    %s17 = sphi 0, %s29
    %s18 = sphi 0, %s25
    %s19 = sphi 0, %s17
    %s20 = sphi 0, %s18
    %s21 = sphi 0, %s19
    %s22 = sphi 0, %s20
    %s34 = sphi 0, %s36
    %s37 = sphi 0, %s34
    %s38 = sphi 0, %s37
    %s54 = sphi 0, %s38
    %s60 = sphi 0, %s62
    %s63 = sphi 0, %s60
    %s64 = sphi 0, %s63
    %s80 = sphi 0, %s64
    %s86 = sphi 0, %s88
    %s89 = sphi 0, %s86
    %s90 = sphi 0, %s89
    %s106 = sphi 0, %s90
    %s112 = sphi 0, %s114
    %s115 = sphi 0, %s112
    %s116 = sphi 0, %s115
    %s132 = sphi 0, %s116
    %s140 = sphi 0, %s142
    %s143 = sphi 0, %s140
    %s144 = sphi 0, %s143
    %s160 = sphi 0, %s144
  $region4: #{bit_estimator_forward.1} parent=0 // loop_header_branch
    %13 = sbr.rel (%p11) target = $region8
  $region5: #{bit_estimator_forward.1} parent=0 // loop_body
    %s15 = ssub.s32 %s10, 1
    %s16 = ssub.s32 %s10, 2
    %s23 = sadd.s32 1, %s18
    %p24 = scmp.ge.s32.totalorder %s23, 2
    %s25 = scalar_select %p24, 0, %s23
    %s26 = sadd.s32 1, %s17
    %s27 = scalar_select %p24, %s26, %s17
    %p28 = scmp.ge.s32.totalorder %s27, 1
    %s29 = scalar_select %p28, 0, %s27
    %s30 = ssub.s32 %s17, %s29
    %s31 = ssub.s32 %s18, %s25
    %s32 = sor.u32 %s30, %s31
    %p33 = scmp.eq.s32.totalorder %s32, 0
    %s35 = sadd.s32 %s34, 1
    %s36 = scalar_select %p33, %s34, %s35
    %p39 = pneg %p33
    %p40 = scmp.eq.s32.totalorder %s10, 1
    %p41 = por %p39, %p40
    %p42 = scmp.ne.s32.totalorder %s34, %s37
    %p43 = scmp.eq.s32.totalorder %s10, 0
    %p44 = por %p42, %p43
    %p45 = scmp.ne.s32.totalorder %s34, %s37
    %p46 = scmp.eq.s32.totalorder %s15, 1
    %p47 = por %p45, %p46
    %p48 = scmp.ne.s32.totalorder %s37, %s38
    %p49 = scmp.eq.s32.totalorder %s15, 0
    %p50 = por %p48, %p49
    %p51 = scmp.ne.s32.totalorder %s37, %s38
    %p52 = scmp.eq.s32.totalorder %s16, 1
    %p53 = por %p51, %p52
    %p55 = scmp.ne.s32.totalorder %s38, %s54
    %p56 = scmp.eq.s32.totalorder %s16, 0
    %p57 = por %p55, %p56
    %s58 = ssub.s32 %s17, %s29
    %p59 = scmp.eq.s32.totalorder %s58, 0
    %s61 = sadd.s32 %s60, 1
    %s62 = scalar_select %p59, %s60, %s61
    %p65 = pneg %p59
    %p66 = scmp.eq.s32.totalorder %s10, 1
    %p67 = por %p65, %p66
    %p68 = scmp.ne.s32.totalorder %s60, %s63
    %p69 = scmp.eq.s32.totalorder %s10, 0
    %p70 = por %p68, %p69
    %p71 = scmp.ne.s32.totalorder %s60, %s63
    %p72 = scmp.eq.s32.totalorder %s15, 1
    %p73 = por %p71, %p72
    %p74 = scmp.ne.s32.totalorder %s63, %s64
    %p75 = scmp.eq.s32.totalorder %s15, 0
    %p76 = por %p74, %p75
    %p77 = scmp.ne.s32.totalorder %s63, %s64
    %p78 = scmp.eq.s32.totalorder %s16, 1
    %p79 = por %p77, %p78
    %p81 = scmp.ne.s32.totalorder %s64, %s80
    %p82 = scmp.eq.s32.totalorder %s16, 0
    %p83 = por %p81, %p82
    %s84 = ssub.s32 %s17, %s29
    %p85 = scmp.eq.s32.totalorder %s84, 0
    %s87 = sadd.s32 %s86, 1
    %s88 = scalar_select %p85, %s86, %s87
    %p91 = pneg %p85
    %p92 = scmp.eq.s32.totalorder %s10, 1
    %p93 = por %p91, %p92
    %p94 = scmp.ne.s32.totalorder %s86, %s89
    %p95 = scmp.eq.s32.totalorder %s10, 0
    %p96 = por %p94, %p95
    %p97 = scmp.ne.s32.totalorder %s86, %s89
    %p98 = scmp.eq.s32.totalorder %s15, 1
    %p99 = por %p97, %p98
    %p100 = scmp.ne.s32.totalorder %s89, %s90
    %p101 = scmp.eq.s32.totalorder %s15, 0
    %p102 = por %p100, %p101
    %p103 = scmp.ne.s32.totalorder %s89, %s90
    %p104 = scmp.eq.s32.totalorder %s16, 1
    %p105 = por %p103, %p104
    %p107 = scmp.ne.s32.totalorder %s90, %s106
    %p108 = scmp.eq.s32.totalorder %s16, 0
    %p109 = por %p107, %p108
    %s110 = ssub.s32 %s17, %s29
    %p111 = scmp.eq.s32.totalorder %s110, 0
    %s113 = sadd.s32 %s112, 1
    %s114 = scalar_select %p111, %s112, %s113
    %p117 = pneg %p111
    %p118 = scmp.eq.s32.totalorder %s10, 1
    %p119 = por %p117, %p118
    %p120 = scmp.ne.s32.totalorder %s112, %s115
    %p121 = scmp.eq.s32.totalorder %s10, 0
    %p122 = por %p120, %p121
    %p123 = scmp.ne.s32.totalorder %s112, %s115
    %p124 = scmp.eq.s32.totalorder %s15, 1
    %p125 = por %p123, %p124
    %p126 = scmp.ne.s32.totalorder %s115, %s116
    %p127 = scmp.eq.s32.totalorder %s15, 0
    %p128 = por %p126, %p127
    %p129 = scmp.ne.s32.totalorder %s115, %s116
    %p130 = scmp.eq.s32.totalorder %s16, 1
    %p131 = por %p129, %p130
    %p133 = scmp.ne.s32.totalorder %s116, %s132
    %p134 = scmp.eq.s32.totalorder %s16, 0
    %p135 = por %p133, %p134
    %s136 = ssub.s32 %s17, %s29
    %s137 = ssub.s32 %s18, %s25
    %s138 = sor.u32 %s136, %s137
    %p139 = scmp.eq.s32.totalorder %s138, 0
    %s141 = sadd.s32 %s140, 1
    %s142 = scalar_select %p139, %s140, %s141
    %p145 = pneg %p139
    %p146 = scmp.eq.s32.totalorder %s10, 1
    %p147 = por %p145, %p146
    %p148 = scmp.ne.s32.totalorder %s140, %s143
    %p149 = scmp.eq.s32.totalorder %s10, 0
    %p150 = por %p148, %p149
    %p151 = scmp.ne.s32.totalorder %s140, %s143
    %p152 = scmp.eq.s32.totalorder %s15, 1
    %p153 = por %p151, %p152
    %p154 = scmp.ne.s32.totalorder %s143, %s144
    %p155 = scmp.eq.s32.totalorder %s15, 0
    %p156 = por %p154, %p155
    %p157 = scmp.ne.s32.totalorder %s143, %s144
    %p158 = scmp.eq.s32.totalorder %s16, 1
    %p159 = por %p157, %p158
    %p161 = scmp.ne.s32.totalorder %s144, %s160
    %p162 = scmp.eq.s32.totalorder %s16, 0
    %p163 = por %p161, %p162
    %p164 = scmp.le.s32.totalorder 1, %s10
    %p165 = scmp.lt.s32.totalorder %s10, 3
    %p166 = pnand %p164, %p165
    %p167 = pneg %p166
    // Predicated region
    $region9: #{bit_estimator_forward.1} parent=5 // pred_check
      _
    $region10: #{bit_estimator_forward.1} parent=5 // pred_check_branch
      %169 = sbr.rel (%p166) target = $region12
    $region11: #{bit_estimator_forward.1} parent=5 // pred_region
      %s170 = ssub.s32 %s10, 1
      // Predicated region
      $region13: #{bit_estimator_forward.1} parent=11 // pred_check
        %p171 = pneg %p76
      $region14: #{bit_estimator_forward.1} parent=11 // pred_check_branch
        %173 = sbr.rel (%p171) target = $region16
      $region15: #{bit_estimator_forward.1} parent=11 // pred_region
        %p174 = scmp.lt.s32.totalorder %s19, 0
        %s175 = scalar_select %p174, %s19, 0
        %s176 = smul.addr %s175, 8
        %s177 = scalar_lea.vmem %s1, %s176
      $region16: #{bit_estimator_forward.1} parent=11 // pred_fallthru
        _
      // Predicated region
      $region17: #{bit_estimator_forward.1} parent=11 // pred_check
        %p178 = pneg %p102
      $region18: #{bit_estimator_forward.1} parent=11 // pred_check_branch
        %180 = sbr.rel (%p178) target = $region20
      $region19: #{bit_estimator_forward.1} parent=11 // pred_region
        %p181 = scmp.lt.s32.totalorder %s19, 0
        %s182 = scalar_select %p181, %s19, 0
        %s183 = smul.addr %s182, 8
        %s184 = scalar_lea.vmem %s2, %s183
      $region20: #{bit_estimator_forward.1} parent=11 // pred_fallthru
        _
      // Predicated region
      $region21: #{bit_estimator_forward.1} parent=11 // pred_check
        %p185 = pneg %p128
      $region22: #{bit_estimator_forward.1} parent=11 // pred_check_branch
        %187 = sbr.rel (%p185) target = $region24
      $region23: #{bit_estimator_forward.1} parent=11 // pred_region
        %p188 = scmp.lt.s32.totalorder %s19, 0
        %s189 = scalar_select %p188, %s19, 0
        %s190 = smul.addr %s189, 8
        %s191 = scalar_lea.vmem %s3, %s190
      $region24: #{bit_estimator_forward.1} parent=11 // pred_fallthru
        _
    $region12: #{bit_estimator_forward.1} parent=5 // pred_fallthru
      _
    %p192 = scmp.lt.s32.totalorder %s10, 2
    // Predicated region
    $region25: #{bit_estimator_forward.1} parent=5 // pred_check
      %p193 = pneg %p192
    $region26: #{bit_estimator_forward.1} parent=5 // pred_check_branch
      %195 = sbr.rel (%p193) target = $region28
    $region27: #{bit_estimator_forward.1} parent=5 // pred_region
      // Predicated region
      $region29: #{bit_estimator_forward.1} parent=27 // pred_check
        %p196 = pneg %p44
      $region30: #{bit_estimator_forward.1} parent=27 // pred_check_branch
        %198 = sbr.rel (%p196) target = $region32
      $region31: #{bit_estimator_forward.1} parent=27 // pred_region
        %p199 = scmp.lt.s32.totalorder %s17, 0
        %s200 = scalar_select %p199, %s17, 0
        %p201 = scmp.lt.s32.totalorder %s18, 1
        %s202 = scalar_select %p201, %s18, 1
        %s203 = smul.addr %s200, 2
        %s204 = sadd.s32 %s202, %s203
        %s205 = smul.addr %s204, 8
        %s206 = scalar_lea.vmem %s0, %s205
      $region32: #{bit_estimator_forward.1} parent=27 // pred_fallthru
        _
    $region28: #{bit_estimator_forward.1} parent=5 // pred_fallthru
      _
    %p207 = scmp.le.s32.totalorder 1, %s10
    %p208 = scmp.lt.s32.totalorder %s10, 3
    %p209 = pnand %p207, %p208
    %p210 = pneg %p209
    // Predicated region
    $region33: #{bit_estimator_forward.1} parent=5 // pred_check
      _
    $region34: #{bit_estimator_forward.1} parent=5 // pred_check_branch
      %212 = sbr.rel (%p209) target = $region36
    $region35: #{bit_estimator_forward.1} parent=5 // pred_region
      %s213 = ssub.s32 %s10, 1
      %p214 = scmp.lt.s32.totalorder %s19, 0
      %s215 = scalar_select %p214, %s19, 0
      %p216 = scmp.lt.s32.totalorder %s20, 1
      %s217 = scalar_select %p216, %s20, 1
      %s218 = smul.addr %s215, 2
      %s219 = sadd.s32 %s217, %s218
      %s220 = smul.addr %s219, 8
      %s221 = scalar_lea.vmem %s0, %s220
      %p222 = pneg %p50
      %p223 = pneg %p47
      %p224 = scmp.lt.s32.totalorder %s19, 0
      %s225 = scalar_select %p224, %s19, 0
      %s226 = smul.addr %s225, 8
      %s227 = scalar_lea.vmem %s1, %s226
      %p228 = pneg %p76
      %p229 = pneg %p73
      %p230 = scmp.lt.s32.totalorder %s19, 0
      %s231 = scalar_select %p230, %s19, 0
      %s232 = smul.addr %s231, 8
      %s233 = scalar_lea.vmem %s2, %s232
      %p234 = pneg %p102
      %p235 = pneg %p99
      %p236 = scmp.lt.s32.totalorder %s19, 0
      %s237 = scalar_select %p236, %s19, 0
      %s238 = smul.addr %s237, 8
      %s239 = scalar_lea.vmem %s3, %s238
      %p240 = pneg %p128
      %p241 = pneg %p125
      %p242 = pneg %p156
      %p243 = pneg %p153
      %p244 = scmp.lt.s32.totalorder %s19, 0
      %s245 = scalar_select %p244, %s19, 0
      %p246 = scmp.lt.s32.totalorder %s20, 1
      %s247 = scalar_select %p246, %s20, 1
      %s248 = smul.addr %s245, 2
      %s249 = sadd.s32 %s247, %s248
      %s250 = smul.addr %s249, 8
      %s251 = scalar_lea.vmem %s4, %s250
      %p252 = scmp.lt.s32.totalorder %s19, 0
      %s253 = scalar_select %p252, %s19, 0
      %p254 = scmp.lt.s32.totalorder %s20, 1
      %s255 = scalar_select %p254, %s20, 1
      %s256 = smul.addr %s253, 2
      %s257 = sadd.s32 %s255, %s256
      %s258 = smul.addr %s257, 8
      %s259 = scalar_lea.vmem %s0, %s258
      %p260 = scmp.lt.s32.totalorder %s19, 0
      %s261 = scalar_select %p260, %s19, 0
      %s262 = smul.addr %s261, 8
      %s263 = scalar_lea.vmem %s1, %s262
      %p264 = scmp.lt.s32.totalorder %s19, 0
      %s265 = scalar_select %p264, %s19, 0
      %s266 = smul.addr %s265, 8
      %s267 = scalar_lea.vmem %s2, %s266
      %p268 = scmp.lt.s32.totalorder %s19, 0
      %s269 = scalar_select %p268, %s19, 0
      %s270 = smul.addr %s269, 8
      %s271 = scalar_lea.vmem %s3, %s270
      %p272 = scmp.lt.s32.totalorder %s19, 0
      %s273 = scalar_select %p272, %s19, 0
      %p274 = scmp.lt.s32.totalorder %s20, 1
      %s275 = scalar_select %p274, %s20, 1
      %s276 = smul.addr %s273, 2
      %s277 = sadd.s32 %s275, %s276
      %s278 = smul.addr %s277, 8
      %s279 = scalar_lea.vmem %s4, %s278
      %v280 = vld [vmem:[%s259] sm:$0xff]
      %v281 = vld [vmem:[%s263] sm:$0xff]
      %283 = vset.pattern.permute.xlu0 0
      %284 = vperm.xlu0 %283, %v281
      %v285 = vpop.permute.xlu0 %284
      %v287 = vmul.f32 %v280, %v285
      %v288 = vld [vmem:[%s267] sm:$0xff]
      %290 = vset.pattern.permute.xlu0 0
      %291 = vperm.xlu0 %290, %v288
      %v292 = vpop.permute.xlu0 %291
      %v294 = vadd.f32 %v287, %v292
      %v295 = vtanh.pop %v294
      %v296 = vld [vmem:[%s271] sm:$0xff]
      %298 = vset.pattern.permute.xlu0 0
      %299 = vperm.xlu0 %298, %v296
      %v300 = vpop.permute.xlu0 %299
      %v302 = vmul.f32 %v295, %v300
      %v303 = vadd.f32 %v294, %v302
      %s304 = scalar_lea.vmem %s263, 8
      %v305 = vld [vmem:[%s304] sm:$0xff]
      %307 = vset.pattern.permute.xlu0 0
      %308 = vperm.xlu0 %307, %v305
      %v309 = vpop.permute.xlu0 %308
      %v311 = vmul.f32 %v303, %v309
      %s312 = scalar_lea.vmem %s267, 8
      %v313 = vld [vmem:[%s312] sm:$0xff]
      %315 = vset.pattern.permute.xlu0 0
      %316 = vperm.xlu0 %315, %v313
      %v317 = vpop.permute.xlu0 %316
      %v319 = vadd.f32 %v311, %v317
      %v320 = vtanh.pop %v319
      %s321 = scalar_lea.vmem %s271, 8
      %v322 = vld [vmem:[%s321] sm:$0xff]
      %324 = vset.pattern.permute.xlu0 0
      %325 = vperm.xlu0 %324, %v322
      %v326 = vpop.permute.xlu0 %325
      %v328 = vmul.f32 %v320, %v326
      %v329 = vadd.f32 %v319, %v328
      %s330 = scalar_lea.vmem %s263, 16
      %v331 = vld [vmem:[%s330] sm:$0xff]
      %333 = vset.pattern.permute.xlu0 0
      %334 = vperm.xlu0 %333, %v331
      %v335 = vpop.permute.xlu0 %334
      %v337 = vmul.f32 %v329, %v335
      %s338 = scalar_lea.vmem %s267, 16
      %v339 = vld [vmem:[%s338] sm:$0xff]
      %341 = vset.pattern.permute.xlu0 0
      %342 = vperm.xlu0 %341, %v339
      %v343 = vpop.permute.xlu0 %342
      %v345 = vadd.f32 %v337, %v343
      %v346 = vtanh.pop %v345
      %s347 = scalar_lea.vmem %s271, 16
      %v348 = vld [vmem:[%s347] sm:$0xff]
      %350 = vset.pattern.permute.xlu0 0
      %351 = vperm.xlu0 %350, %v348
      %v352 = vpop.permute.xlu0 %351
      %v354 = vmul.f32 %v346, %v352
      %v355 = vadd.f32 %v345, %v354
      %s356 = scalar_lea.vmem %s263, 24
      %v357 = vld [vmem:[%s356] sm:$0xff]
      %359 = vset.pattern.permute.xlu0 0
      %360 = vperm.xlu0 %359, %v357
      %v361 = vpop.permute.xlu0 %360
      %v363 = vmul.f32 %v355, %v361
      %s364 = scalar_lea.vmem %s267, 24
      %v365 = vld [vmem:[%s364] sm:$0xff]
      %367 = vset.pattern.permute.xlu0 0
      %368 = vperm.xlu0 %367, %v365
      %v369 = vpop.permute.xlu0 %368
      %v371 = vadd.f32 %v363, %v369
      %v372 = vmul.f32 %v371, 0.5
      %v373 = vtanh.pop %v372
      %v374 = vadd.f32 %v373, 1.0
      %v375 = vmul.f32 %v374, 0.5
      %376 = vst [vmem:[%s279] sm:$0xff] %v375
      %p377 = scmp.lt.s32.totalorder %s19, 0
      %s378 = scalar_select %p377, %s19, 0
      %p379 = scmp.lt.s32.totalorder %s20, 1
      %s380 = scalar_select %p379, %s20, 1
      %s381 = smul.addr %s378, 2
      %s382 = sadd.s32 %s380, %s381
      %s383 = smul.addr %s382, 8
      %s384 = scalar_lea.vmem %s4, %s383
      // Predicated region
      $region37: #{bit_estimator_forward.1} parent=35 // pred_check
        %p385 = pneg %p153
      $region38: #{bit_estimator_forward.1} parent=35 // pred_check_branch
        %387 = sbr.rel (%p385) target = $region40
      $region39: #{bit_estimator_forward.1} parent=35 // pred_region
        _
      $region40: #{bit_estimator_forward.1} parent=35 // pred_fallthru
        _
    $region36: #{bit_estimator_forward.1} parent=5 // pred_fallthru
      _
    %p388 = scmp.le.s32.totalorder 2, %s10
    // Predicated region
    $region41: #{bit_estimator_forward.1} parent=5 // pred_check
      %p389 = pneg %p388
    $region42: #{bit_estimator_forward.1} parent=5 // pred_check_branch
      %391 = sbr.rel (%p389) target = $region44
    $region43: #{bit_estimator_forward.1} parent=5 // pred_region
      %s392 = ssub.s32 %s10, 2
      // Predicated region
      $region45: #{bit_estimator_forward.1} parent=43 // pred_check
        %p393 = pneg %p159
      $region46: #{bit_estimator_forward.1} parent=43 // pred_check_branch
        %395 = sbr.rel (%p393) target = $region48
      $region47: #{bit_estimator_forward.1} parent=43 // pred_region
        %p396 = scmp.lt.s32.totalorder %s21, 0
        %s397 = scalar_select %p396, %s21, 0
        %p398 = scmp.lt.s32.totalorder %s22, 1
        %s399 = scalar_select %p398, %s22, 1
        %s400 = smul.addr %s397, 2
        %s401 = sadd.s32 %s399, %s400
        %s402 = smul.addr %s401, 8
        %s403 = scalar_lea.vmem %s4, %s402
      $region48: #{bit_estimator_forward.1} parent=43 // pred_fallthru
        _
    $region44: #{bit_estimator_forward.1} parent=5 // pred_fallthru
      _
  $region6: #{bit_estimator_forward.1} parent=0 // loop_footer
    %s14 = sadd.s32 1, %s10
  $region7: #{bit_estimator_forward.1} parent=0 // loop_footer_branch
    %9 = sbr.rel target = $region3
  $region8: #{bit_estimator_forward.1} parent=0 // loop_exit
    _

</llo_original>
